<compile_context>
chip_gen: v7x
topology: tpu7x:2x2x1
jax: 0.10.0
libtpu: 0.0.40
codegen_flags: <defaults>
</compile_context>

<pallas_src>
import math
from functools import lru_cache

import jax
import jax.numpy as jnp
from jax import lax
from jax.experimental import pallas as pl
from jax.experimental.pallas import tpu as pltpu


_LANE = 128
_MAX_CHUNKS = 32        # cap on the statically-unrolled inner chunk loop
_REG_ELEMS = 8192       # R_eff * chunk cap: keeps register partials ~<= 40 vregs


@lru_cache(maxsize=1)
def _tpu_caps():
    """Returns (input_vmem_budget, scoped_vmem_cap, num_tensorcores, is_v7)."""
    is_v7 = False
    vmem_phys = 128 * 2 ** 20
    try:
        kind = jax.devices()[0].device_kind.lower()
        is_v7 = "v7" in kind
    except Exception:
        pass
    try:
        info = pltpu.get_tpu_info()
        vmem_phys = int(getattr(info, "vmem_capacity_bytes", vmem_phys))
    except Exception:
        pass
    if is_v7 or vmem_phys <= 64 * 2 ** 20:
        # v7x-class: 64 MiB per TensorCore, 2 TCs -> stay conservative.
        return 16 * 2 ** 20, 40 * 2 ** 20, (2 if is_v7 else 1), is_v7
    # v5e / v6e: 128 MiB VMEM, single TensorCore per chip.
    return 32 * 2 ** 20, 64 * 2 ** 20, 1, is_v7


def _make_gdice_kernel(*, rows, chunk, n_chunks, ts, n_s, s_len, needs_mask,
                       multi_step):
    """Kernel factory for a given static tiling."""

    def partials(prob_ref, label_ref, tile_base):
        # VPU-only hot loop: lane-wide register partials, no XLU in steady state.
        u = jnp.zeros((rows, chunk), jnp.float32)
        pr = jnp.zeros((rows, chunk), jnp.float32)
        lr = jnp.zeros((rows, chunk), jnp.float32)
        if needs_mask:
            # Hoisted iota (JAX does not CSE broadcast_in_dim inside loops).
            lane = lax.broadcasted_iota(jnp.int32, (rows, chunk), 1)
            rem0 = s_len - tile_base            # valid lanes left in this tile
        for k in range(n_chunks):               # static unroll, <= _MAX_CHUNKS
            off = k * chunk
            p = prob_ref[:, pl.ds(off, chunk)].astype(jnp.float32)
            l = label_ref[:, pl.ds(off, chunk)].astype(jnp.float32)
            if needs_mask:
                m = lane < (rem0 - off)         # tail / redundant lanes -> 0
                p = jnp.where(m, p, 0.0)
                l = jnp.where(m, l, 0.0)
            u = u + p * l
            pr = pr + p * p
            lr = lr + l
        return u, pr, lr

    if not multi_step:
        # Single grid step per parallel slice: no VMEM accumulators, reduce the
        # register partials directly (one XLU reduction per output row block).
        def kernel(prob_ref, label_ref, out_ref):
            tile_base = (pl.program_id(0) * n_s + pl.program_id(1)) * ts
            u, pr, lr = partials(prob_ref, label_ref, tile_base)
            out_ref[0, 0] = jnp.sum(u, axis=-1, keepdims=True)
            out_ref[0, 1] = jnp.sum(pr, axis=-1, keepdims=True)
            out_ref[0, 2] = jnp.sum(lr, axis=-1, keepdims=True)
        return kernel

    def kernel(prob_ref, label_ref, out_ref, acc_ref):
        s = pl.program_id(1)

        @pl.when(s == 0)
        def _init():
            acc_ref[...] = jnp.zeros(acc_ref.shape, acc_ref.dtype)

        tile_base = (pl.program_id(0) * n_s + s) * ts
        u, pr, lr = partials(prob_ref, label_ref, tile_base)
        acc_ref[0] = acc_ref[0] + u
        acc_ref[1] = acc_ref[1] + pr
        acc_ref[2] = acc_ref[2] + lr

        @pl.when(s == pl.num_programs(1) - 1)
        def _finalize():
            # One cross-lane reduction per accumulator, once per parallel slice.
            out_ref[0, 0] = jnp.sum(acc_ref[0], axis=-1, keepdims=True)
            out_ref[0, 1] = jnp.sum(acc_ref[1], axis=-1, keepdims=True)
            out_ref[0, 2] = jnp.sum(acc_ref[2], axis=-1, keepdims=True)

    return kernel


def gdice_loss(prob, label, *, block_s=None, num_parallel=None):
    """prob, label: (N, C, D, H, W) arrays.  Returns per-sample loss (N,)."""
    N, C, D, H, W = prob.shape
    assert label.shape == prob.shape
    S = D * H * W
    R = N * C
    pi, li = prob.dtype.itemsize, label.dtype.itemsize

    input_budget, vmem_cap, n_cores, is_v7 = _tpu_caps()

    # ---- sublane packing: fold spatial factor into rows so rows fill a vreg ----
    req_rows = max(8, 32 // max(1, min(pi, li)))     # 8 (f32) / 16 (bf16) / 32 (i8)
    fold = req_rows // math.gcd(R, req_rows)
    if fold > 1 and S % fold != 0:
        fold = 1
    R_eff, S_eff = R * fold, S // fold

    prob2 = prob.reshape(R_eff, S_eff)               # row-major, no data movement
    label2 = label.reshape(R_eff, S_eff)

    # ---- parallel axis: one spatial slice per TensorCore (2 on v7x, else 1) ----
    auto_p = num_parallel is None
    P = n_cores if auto_p else max(1, int(num_parallel))

    # ---- chunk / tile selection ------------------------------------------------
    # chunk: lane width of the register-resident partials (bounded vreg footprint)
    chunk_cap = min(1024, max(_LANE, (_REG_ELEMS // R_eff) // _LANE * _LANE))
    if block_s is None:
        per_core = pl.cdiv(S_eff, P)
        ts = min(
            ((per_core + _LANE - 1) // _LANE) * _LANE,                 # core share
            max(_LANE, (input_budget // (2 * R_eff * (pi + li))) // _LANE * _LANE),
            chunk_cap * _MAX_CHUNKS,                                   # unroll cap
        )
    else:
        ts = max(_LANE, (int(block_s) // _LANE) * _LANE)
    if S_eff <= _LANE:
        ts = S_eff                                    # full-width block
    else:
        ts = max(_LANE, min(ts, (S_eff // _LANE) * _LANE))   # block stays in-array
    chunk = min(chunk_cap, ts)
    n_chunks = max(1, ts // chunk)
    ts = n_chunks * chunk

    # ---- grid: parallel leading axis, spatial reduction last ("arbitrary") ----
    n_total = pl.cdiv(S_eff, ts)                      # real spatial blocks
    P = max(1, min(P, n_total))
    n_s = pl.cdiv(n_total, P)
    needs_mask = (P * n_s * ts) != S_eff              # tail lanes masked in-kernel
    needs_clamp = (P * n_s) > n_total                 # redundant steps re-read last
    multi_step = n_s > 1

    if needs_clamp:
        last = n_total - 1
        in_map = lambda p, s: (0, jnp.minimum(p * n_s + s, last))
    else:
        in_map = lambda p, s: (0, p * n_s + s)
    out_map = lambda p, s: (p, 0, 0, 0)

    kernel = _make_gdice_kernel(
        rows=R_eff, chunk=chunk, n_chunks=n_chunks, ts=ts, n_s=n_s,
        s_len=S_eff, needs_mask=needs_mask, multi_step=multi_step)

    scratch = [pltpu.VMEM((3, R_eff, chunk), jnp.float32)] if multi_step else []

    ws = 2 * R_eff * ts * (pi + li)                   # double-buffered inputs
    if multi_step:
        ws += 3 * R_eff * chunk * 4
    vmem_limit = int(min(vmem_cap, max(32 * 2 ** 20, 2 * ws + (2 << 20))))

    grid_spec = pltpu.PrefetchScalarGridSpec(
        num_scalar_prefetch=0,
        grid=(P, n_s),
        in_specs=[pl.BlockSpec((R_eff, ts), in_map),
                  pl.BlockSpec((R_eff, ts), in_map)],
        out_specs=pl.BlockSpec((1, 3, R_eff, 1), out_map),
        scratch_shapes=scratch,
    )
    cost = pl.CostEstimate(
        flops=5 * R_eff * S_eff,
        transcendentals=0,
        bytes_accessed=R_eff * S_eff * (pi + li) + P * 3 * R_eff * 4,
    )

    def run(dim_sems):
        return pl.pallas_call(
            kernel,
            out_shape=jax.ShapeDtypeStruct((P, 3, R_eff, 1), jnp.float32),
            grid_spec=grid_spec,
            compiler_params=pltpu.CompilerParams(
                dimension_semantics=dim_sems,
                vmem_limit_bytes=vmem_limit,
            ),
            cost_estimate=cost,
        )(prob2, label2)

    fallback_sems = ("parallel", "arbitrary")
    core_par = getattr(pltpu, "CORE_PARALLEL", None)
    arb = getattr(pltpu, "ARBITRARY", "arbitrary")
    if auto_p and is_v7 and P == n_cores and P > 1 and core_par is not None:
        try:
            # Shard the spatial slices across the two v7x TensorCores.
            out = run((core_par, arb))
        except Exception:
            out = run(fallback_sems)
    else:
        out = run(fallback_sems)

    # ---- tiny O(N*C) epilogue in plain JAX (matches the PyTorch reference) ----
    sums = jnp.sum(out[..., 0], axis=0)               # (3, R_eff)
    if fold > 1:
        sums = sums.reshape(3, R, fold).sum(axis=-1)  # undo the row fold
    union = sums[0].reshape(N, C)
    prob_r = sums[1].reshape(N, C)
    label_r = sums[2].reshape(N, C)
    weight = 1.0 / (label_r * label_r + 1.0)
    num = jnp.sum((union * weight)[:, 1:], axis=1)
    den = jnp.sum(((prob_r + label_r) * weight)[:, 1:], axis=1)
    return 1.0 - 2.0 * num / den


def gdice_loss_ref(prob, label):
    N, C = prob.shape[0], prob.shape[1]
    p = prob.reshape(N, C, -1).astype(jnp.float32)
    l = label.reshape(N, C, -1).astype(jnp.float32)
    union = jnp.sum(p * l, axis=2)
    prob_r = jnp.sum(p * p, axis=2)
    label_r = jnp.sum(l, axis=2)
    weight = 1.0 / (label_r ** 2 + 1.0)
    loss = jnp.sum((union * weight)[:, 1:], axis=1) / jnp.sum(
        ((prob_r + label_r) * weight)[:, 1:], axis=1)
    return 1.0 - 2.0 * loss


def _make_inputs(key, N, C, D, H, W):
    k1, k2 = jax.random.split(key)
    logits = jax.random.normal(k1, (N, C, D, H, W), dtype=jnp.float32)
    prob = jax.nn.softmax(logits, axis=1)                  # softmax over channels
    cls = jax.random.randint(k2, (N, D, H, W), 0, C)
    label = jax.nn.one_hot(cls, C, axis=1, dtype=jnp.float32)  # one-hot labels
    return prob, label


if __name__ == "__main__":
    key = jax.random.PRNGKey(0)
    keys = jax.random.split(key, 3)

    # 1) Aligned shape, default (auto) tiling: single grid step per core.
    prob, label = _make_inputs(keys[0], 2, 4, 8, 16, 16)   # S = 2048, R = 8
    ref = gdice_loss_ref(prob, label)
    out = jax.block_until_ready(gdice_loss(prob, label))
    assert out.shape == (2,)
    assert jnp.allclose(out, ref, atol=1e-5, rtol=1e-5), (out, ref)

    # 2) Forced small blocks + 2-way spatial split: multi-step accumulator path
    #    (runs as a serial loop on single-TensorCore chips).
    out = jax.block_until_ready(gdice_loss(prob, label, block_s=512, num_parallel=2))
    assert jnp.allclose(out, ref, atol=1e-5, rtol=1e-5), (out, ref)

    # 3) bf16 inputs: exercises the sublane row-folding path (R=8 -> 16 rows).
    prob_bf = prob.astype(jnp.bfloat16)
    label_bf = label.astype(jnp.bfloat16)
    ref_bf = gdice_loss_ref(prob_bf, label_bf)
    out = jax.block_until_ready(gdice_loss(prob_bf, label_bf))
    assert jnp.allclose(out, ref_bf, atol=1e-3, rtol=1e-3), (out, ref_bf)

    # 4) Ragged spatial size: exercises the in-kernel tail mask (no jnp.pad).
    prob, label = _make_inputs(keys[1], 2, 4, 5, 9, 13)    # S = 585
    ref = gdice_loss_ref(prob, label)
    out = jax.block_until_ready(gdice_loss(prob, label))
    assert jnp.allclose(out, ref, atol=1e-5, rtol=1e-5), (out, ref)

    # 5) Larger ragged case: multi-step pipeline + multi-chunk inner loop + mask
    #    (+ index-map clamp when the tile count does not split evenly per core).
    prob, label = _make_inputs(keys[2], 2, 4, 33, 36, 35)  # S = 41580
    ref = gdice_loss_ref(prob, label)
    out = jax.block_until_ready(gdice_loss(prob, label))
    assert jnp.allclose(out, ref, atol=2e-4, rtol=2e-4), (out, ref)

    print("KERNEL_OK")
</pallas_src>

<mosaic_0001>
module attributes {stable_mosaic.version = 11 : i64} {
  func.func @kernel(%arg0: i32, %arg1: i32, %arg2: memref<8x2048xf32, #tpu.memory_space<vmem>>, %arg3: memref<8x2048xf32, #tpu.memory_space<vmem>>, %arg4: memref<1x3x8x1xf32, #tpu.memory_space<vmem>>) attributes {dimension_semantics = [#tpu.dimension_semantics<parallel>, #tpu.dimension_semantics<arbitrary>], iteration_bounds = array<i64: 1, 1>, scalar_prefetch = 0 : i64, scratch_operands = 0 : i64, tpu.core_type = #tpu.core_type<tc>, window_params = [{transform_indices = @transform_0, window_bounds = array<i64: 8, 2048>}, {transform_indices = @transform_1, window_bounds = array<i64: 8, 2048>}, {transform_indices = @transform_2, window_bounds = array<i64: 1, 3, 8, 1>}]} {
    %cst = arith.constant 0.000000e+00 : f32
    %0 = vector.broadcast %cst : f32 to vector<8x1024xf32>
    %cst_0 = arith.constant 0.000000e+00 : f32
    %1 = vector.broadcast %cst_0 : f32 to vector<8x1024xf32>
    %cst_1 = arith.constant 0.000000e+00 : f32
    %2 = vector.broadcast %cst_1 : f32 to vector<8x1024xf32>
    %c0 = arith.constant 0 : index
    %c0_2 = arith.constant 0 : index
    %3 = vector.load %arg2[%c0, %c0_2] : memref<8x2048xf32, #tpu.memory_space<vmem>>, vector<8x1024xf32>
    %c0_3 = arith.constant 0 : index
    %c0_4 = arith.constant 0 : index
    %4 = vector.load %arg3[%c0_3, %c0_4] : memref<8x2048xf32, #tpu.memory_space<vmem>>, vector<8x1024xf32>
    %5 = arith.mulf %3, %4 : vector<8x1024xf32>
    %6 = arith.addf %0, %5 : vector<8x1024xf32>
    %7 = arith.mulf %3, %3 : vector<8x1024xf32>
    %8 = arith.addf %1, %7 : vector<8x1024xf32>
    %9 = arith.addf %2, %4 : vector<8x1024xf32>
    %c0_5 = arith.constant 0 : index
    %c1024 = arith.constant 1024 : index
    %10 = vector.load %arg2[%c0_5, %c1024] : memref<8x2048xf32, #tpu.memory_space<vmem>>, vector<8x1024xf32>
    %c0_6 = arith.constant 0 : index
    %c1024_7 = arith.constant 1024 : index
    %11 = vector.load %arg3[%c0_6, %c1024_7] : memref<8x2048xf32, #tpu.memory_space<vmem>>, vector<8x1024xf32>
    %12 = arith.mulf %10, %11 : vector<8x1024xf32>
    %13 = arith.addf %6, %12 : vector<8x1024xf32>
    %14 = arith.mulf %10, %10 : vector<8x1024xf32>
    %15 = arith.addf %8, %14 : vector<8x1024xf32>
    %16 = arith.addf %9, %11 : vector<8x1024xf32>
    %cst_8 = arith.constant dense<0.000000e+00> : vector<8xf32>
    %17 = vector.multi_reduction <add>, %13, %cst_8 [1] : vector<8x1024xf32> to vector<8xf32>
    %18 = vector.shape_cast %17 : vector<8xf32> to vector<8x1xf32>
    %c0_9 = arith.constant 0 : index
    %c0_10 = arith.constant 0 : index
    %c0_11 = arith.constant 0 : index
    %c0_12 = arith.constant 0 : index
    %19 = vector.load %arg4[%c0_9, %c0_10, %c0_11, %c0_12] : memref<1x3x8x1xf32, #tpu.memory_space<vmem>>, vector<1x1x8x1xf32>
    %20 = vector.shape_cast %19 : vector<1x1x8x1xf32> to vector<8x1xf32>
    %21 = vector.shape_cast %18 : vector<8x1xf32> to vector<1x1x8x1xf32>
    tpu.vector_store %arg4[%c0_9, %c0_10, %c0_11, %c0_12], %21 {strides = array<i32>} : memref<1x3x8x1xf32, #tpu.memory_space<vmem>>, vector<1x1x8x1xf32>,
    %cst_13 = arith.constant dense<0.000000e+00> : vector<8xf32>
    %22 = vector.multi_reduction <add>, %15, %cst_13 [1] : vector<8x1024xf32> to vector<8xf32>
    %23 = vector.shape_cast %22 : vector<8xf32> to vector<8x1xf32>
    %c0_14 = arith.constant 0 : index
    %c1 = arith.constant 1 : index
    %c0_15 = arith.constant 0 : index
    %c0_16 = arith.constant 0 : index
    %24 = vector.load %arg4[%c0_14, %c1, %c0_15, %c0_16] : memref<1x3x8x1xf32, #tpu.memory_space<vmem>>, vector<1x1x8x1xf32>
    %25 = vector.shape_cast %24 : vector<1x1x8x1xf32> to vector<8x1xf32>
    %26 = vector.shape_cast %23 : vector<8x1xf32> to vector<1x1x8x1xf32>
    tpu.vector_store %arg4[%c0_14, %c1, %c0_15, %c0_16], %26 {strides = array<i32>} : memref<1x3x8x1xf32, #tpu.memory_space<vmem>>, vector<1x1x8x1xf32>,
    %cst_17 = arith.constant dense<0.000000e+00> : vector<8xf32>
    %27 = vector.multi_reduction <add>, %16, %cst_17 [1] : vector<8x1024xf32> to vector<8xf32>
    %28 = vector.shape_cast %27 : vector<8xf32> to vector<8x1xf32>
    %c0_18 = arith.constant 0 : index
    %c2 = arith.constant 2 : index
    %c0_19 = arith.constant 0 : index
    %c0_20 = arith.constant 0 : index
    %29 = vector.load %arg4[%c0_18, %c2, %c0_19, %c0_20] : memref<1x3x8x1xf32, #tpu.memory_space<vmem>>, vector<1x1x8x1xf32>
    %30 = vector.shape_cast %29 : vector<1x1x8x1xf32> to vector<8x1xf32>
    %31 = vector.shape_cast %28 : vector<8x1xf32> to vector<1x1x8x1xf32>
    tpu.vector_store %arg4[%c0_18, %c2, %c0_19, %c0_20], %31 {strides = array<i32>} : memref<1x3x8x1xf32, #tpu.memory_space<vmem>>, vector<1x1x8x1xf32>,
    return
  }
  func.func @transform_0(%arg0: i32, %arg1: i32) -> (i32, i32) {
    %c1_i32 = arith.constant 1 : i32
    %0 = arith.muli %arg0, %c1_i32 : i32
    %1 = arith.addi %0, %arg1 : i32
    %c0_i32 = arith.constant 0 : i32
    %c0_i32_0 = arith.constant 0 : i32
    return %c0_i32, %1 : i32, i32
  }
  func.func @transform_1(%arg0: i32, %arg1: i32) -> (i32, i32) {
    %c1_i32 = arith.constant 1 : i32
    %0 = arith.muli %arg0, %c1_i32 : i32
    %1 = arith.addi %0, %arg1 : i32
    %c0_i32 = arith.constant 0 : i32
    %c0_i32_0 = arith.constant 0 : i32
    return %c0_i32, %1 : i32, i32
  }
  func.func @transform_2(%arg0: i32, %arg1: i32) -> (i32, i32, i32, i32) {
    %c0_i32 = arith.constant 0 : i32
    %c0_i32_0 = arith.constant 0 : i32
    %c0_i32_1 = arith.constant 0 : i32
    %c0_i32_2 = arith.constant 0 : i32
    return %arg0, %c0_i32, %c0_i32_0, %c0_i32_1 : i32, i32, i32, i32
  }
}

</mosaic_0001>

<llo_original>
// kernel: tpu_custom_call.1
$region0: #{tpu_custom_call.1}
  #allocation0 [shape = 'u32[]', space=smem, size = 0x4, offset = 0x4, fixed_abs, tag = 'smem constant byte address 0x4 - core index']
  #allocation1 [shape = 'u32[144,128]{1,0:T(1,128)}', space=vmem, size = 0x12000, scoped, tag = 'internal scratch']
  %s0 = inlined_call_operand.hbm [shape: f32[8,2048], index: 0, kind: input, shape index: {}]
  %s1 = inlined_call_operand.hbm [shape: f32[8,2048], index: 1, kind: input, shape index: {}]
  %s2 = inlined_call_operand.vmem [shape: f32[1,3,8,1], index: 2, kind: output, shape index: {}]
  %s3 = sld [smem:[#allocation0]]
  $region26: #{tpu_custom_call.1} parent=0
    _
  %s5 = ssub.s32 1, %s3
  %s6 = scalar_select 0, %s5, %s3
  $region1: #{tpu_custom_call.1} parent=0
    #allocation2 [shape = 'u8[65536]{0}', space=vmem, size = 0x10000, scoped, tag = 'input window, operand 0, single buffered']
    #allocation3 [shape = 's32[1]{0}', space=sflag, size = 0x4, scoped, tag = 'scoped memory for tpu_custom_call.1']
    #allocation4 [shape = 'u8[65536]{0}', space=vmem, size = 0x10000, scoped, tag = 'input window, operand 1, single buffered']
    #allocation5 [shape = 's32[1]{0}', space=sflag, size = 0x4, scoped, tag = 'scoped memory for tpu_custom_call.1']
    %7 = vsyncpa [#allocation3], 0
    %8 = vsyncpa [#allocation5], 0
    // Predicated region
    $region2: #{tpu_custom_call.1} parent=1 // pred_check
      _
    $region3: #{tpu_custom_call.1} parent=1 // pred_check_branch
      %10 = sbr.rel (0) target = $region5
    $region4: #{tpu_custom_call.1} parent=1 // pred_region
      %s11 = sadd.s32 0, 0
      %s12 = smul.u32 16, %s11
      %s14 = ssub.s32 2048, 2048
      %15 = vsyncadd [#allocation3], %s14
      %s16 = smul.addr %s12, 128
      %s17 = scalar_lea.hbm %s0, %s16
      %s19 = sshll.u32 [#allocation2], 4
      %s20 = int_to_ptr.vmem [resolvable:$true] %s19
      %22 = dma.hbm_to_vmem [thread:$0]  %s17, 2048, %s20, [#allocation3]
    $region5: #{tpu_custom_call.1} parent=1 // pred_fallthru
      _
    // Predicated region
    $region6: #{tpu_custom_call.1} parent=1 // pred_check
      _
    $region7: #{tpu_custom_call.1} parent=1 // pred_check_branch
      %24 = sbr.rel (0) target = $region9
    $region8: #{tpu_custom_call.1} parent=1 // pred_region
      %s25 = sadd.s32 0, 0
      %s26 = smul.u32 16, %s25
      %s28 = ssub.s32 2048, 2048
      %29 = vsyncadd [#allocation5], %s28
      %s30 = smul.addr %s26, 128
      %s31 = scalar_lea.hbm %s1, %s30
      %s33 = sshll.u32 [#allocation4], 4
      %s34 = int_to_ptr.vmem [resolvable:$true] %s33
      %36 = dma.hbm_to_vmem [thread:$0]  %s31, 2048, %s34, [#allocation5]
    $region9: #{tpu_custom_call.1} parent=1 // pred_fallthru
      _
    // Predicated region
    $region10: #{tpu_custom_call.1} parent=1 // pred_check
      _
    $region11: #{tpu_custom_call.1} parent=1 // pred_check_branch
      %38 = sbr.rel (0) target = $region13
    $region12: #{tpu_custom_call.1} parent=1 // pred_region
      %39 = dma.done [#allocation3], 2048
    $region13: #{tpu_custom_call.1} parent=1 // pred_fallthru
      _
    // Predicated region
    $region14: #{tpu_custom_call.1} parent=1 // pred_check
      _
    $region15: #{tpu_custom_call.1} parent=1 // pred_check_branch
      %41 = sbr.rel (0) target = $region17
    $region16: #{tpu_custom_call.1} parent=1 // pred_region
      %42 = dma.done [#allocation5], 2048
    $region17: #{tpu_custom_call.1} parent=1 // pred_fallthru
      _
    %s43 = sadd.s32 0, 0
    %s44 = smul.u32 16, %s43
    %s45 = sadd.s32 0, 0
    %s46 = smul.u32 16, %s45
    %v47 = vld [vmem:[#allocation2] sm:$0xff]
    %v48 = vld [vmem:[#allocation2 + $0x8] sm:$0xff]
    %v49 = vld [vmem:[#allocation2 + $0x10] sm:$0xff]
    %v50 = vld [vmem:[#allocation2 + $0x18] sm:$0xff]
    %v51 = vld [vmem:[#allocation2 + $0x20] sm:$0xff]
    %v52 = vld [vmem:[#allocation2 + $0x28] sm:$0xff]
    %v53 = vld [vmem:[#allocation2 + $0x30] sm:$0xff]
    %v54 = vld [vmem:[#allocation2 + $0x38] sm:$0xff]
    %v55 = vld [vmem:[#allocation4] sm:$0xff]
    %v56 = vld [vmem:[#allocation4 + $0x8] sm:$0xff]
    %v57 = vld [vmem:[#allocation4 + $0x10] sm:$0xff]
    %v58 = vld [vmem:[#allocation4 + $0x18] sm:$0xff]
    %v59 = vld [vmem:[#allocation4 + $0x20] sm:$0xff]
    %v60 = vld [vmem:[#allocation4 + $0x28] sm:$0xff]
    %v61 = vld [vmem:[#allocation4 + $0x30] sm:$0xff]
    %v62 = vld [vmem:[#allocation4 + $0x38] sm:$0xff]
    %v63 = vmul.f32 %v47, %v55
    %v64 = vmul.f32 %v48, %v56
    %v65 = vmul.f32 %v49, %v57
    %v66 = vmul.f32 %v50, %v58
    %v67 = vmul.f32 %v51, %v59
    %v68 = vmul.f32 %v52, %v60
    %v69 = vmul.f32 %v53, %v61
    %v70 = vmul.f32 %v54, %v62
    %v71 = vadd.f32 %v63, 0.0
    %v72 = vadd.f32 %v64, 0.0
    %v73 = vadd.f32 %v65, 0.0
    %v74 = vadd.f32 %v66, 0.0
    %v75 = vadd.f32 %v67, 0.0
    %v76 = vadd.f32 %v68, 0.0
    %v77 = vadd.f32 %v69, 0.0
    %v78 = vadd.f32 %v70, 0.0
    %v79 = vmul.f32 %v47, %v47
    %v80 = vmul.f32 %v48, %v48
    %v81 = vmul.f32 %v49, %v49
    %v82 = vmul.f32 %v50, %v50
    %v83 = vmul.f32 %v51, %v51
    %v84 = vmul.f32 %v52, %v52
    %v85 = vmul.f32 %v53, %v53
    %v86 = vmul.f32 %v54, %v54
    %v87 = vadd.f32 %v79, 0.0
    %v88 = vadd.f32 %v80, 0.0
    %v89 = vadd.f32 %v81, 0.0
    %v90 = vadd.f32 %v82, 0.0
    %v91 = vadd.f32 %v83, 0.0
    %v92 = vadd.f32 %v84, 0.0
    %v93 = vadd.f32 %v85, 0.0
    %v94 = vadd.f32 %v86, 0.0
    %v95 = vadd.f32 %v55, 0.0
    %v96 = vadd.f32 %v56, 0.0
    %v97 = vadd.f32 %v57, 0.0
    %v98 = vadd.f32 %v58, 0.0
    %v99 = vadd.f32 %v59, 0.0
    %v100 = vadd.f32 %v60, 0.0
    %v101 = vadd.f32 %v61, 0.0
    %v102 = vadd.f32 %v62, 0.0
    %v103 = vld [vmem:[#allocation2 + $0x40] sm:$0xff]
    %v104 = vld [vmem:[#allocation2 + $0x48] sm:$0xff]
    %v105 = vld [vmem:[#allocation2 + $0x50] sm:$0xff]
    %v106 = vld [vmem:[#allocation2 + $0x58] sm:$0xff]
    %v107 = vld [vmem:[#allocation2 + $0x60] sm:$0xff]
    %v108 = vld [vmem:[#allocation2 + $0x68] sm:$0xff]
    %v109 = vld [vmem:[#allocation2 + $0x70] sm:$0xff]
    %v110 = vld [vmem:[#allocation2 + $0x78] sm:$0xff]
    %v111 = vld [vmem:[#allocation4 + $0x40] sm:$0xff]
    %v112 = vld [vmem:[#allocation4 + $0x48] sm:$0xff]
    %v113 = vld [vmem:[#allocation4 + $0x50] sm:$0xff]
    %v114 = vld [vmem:[#allocation4 + $0x58] sm:$0xff]
    %v115 = vld [vmem:[#allocation4 + $0x60] sm:$0xff]
    %v116 = vld [vmem:[#allocation4 + $0x68] sm:$0xff]
    %v117 = vld [vmem:[#allocation4 + $0x70] sm:$0xff]
    %v118 = vld [vmem:[#allocation4 + $0x78] sm:$0xff]
    %v119 = vmul.f32 %v103, %v111
    %v120 = vmul.f32 %v104, %v112
    %v121 = vmul.f32 %v105, %v113
    %v122 = vmul.f32 %v106, %v114
    %v123 = vmul.f32 %v107, %v115
    %v124 = vmul.f32 %v108, %v116
    %v125 = vmul.f32 %v109, %v117
    %v126 = vmul.f32 %v110, %v118
    %v127 = vadd.f32 %v71, %v119
    %v128 = vadd.f32 %v72, %v120
    %v129 = vadd.f32 %v73, %v121
    %v130 = vadd.f32 %v74, %v122
    %v131 = vadd.f32 %v75, %v123
    %v132 = vadd.f32 %v76, %v124
    %v133 = vadd.f32 %v77, %v125
    %v134 = vadd.f32 %v78, %v126
    %v135 = vmul.f32 %v103, %v103
    %v136 = vmul.f32 %v104, %v104
    %v137 = vmul.f32 %v105, %v105
    %v138 = vmul.f32 %v106, %v106
    %v139 = vmul.f32 %v107, %v107
    %v140 = vmul.f32 %v108, %v108
    %v141 = vmul.f32 %v109, %v109
    %v142 = vmul.f32 %v110, %v110
    %v143 = vadd.f32 %v87, %v135
    %v144 = vadd.f32 %v88, %v136
    %v145 = vadd.f32 %v89, %v137
    %v146 = vadd.f32 %v90, %v138
    %v147 = vadd.f32 %v91, %v139
    %v148 = vadd.f32 %v92, %v140
    %v149 = vadd.f32 %v93, %v141
    %v150 = vadd.f32 %v94, %v142
    %v151 = vadd.f32 %v95, %v111
    %v152 = vadd.f32 %v96, %v112
    %v153 = vadd.f32 %v97, %v113
    %v154 = vadd.f32 %v98, %v114
    %v155 = vadd.f32 %v99, %v115
    %v156 = vadd.f32 %v100, %v116
    %v157 = vadd.f32 %v101, %v117
    %v158 = vadd.f32 %v102, %v118
    %v159 = vadd.f32 %v127, %v128
    %v160 = vadd.f32 %v159, %v129
    %v161 = vadd.f32 %v160, %v130
    %v162 = vadd.f32 %v161, %v131
    %v163 = vadd.f32 %v162, %v132
    %v164 = vadd.f32 %v163, %v133
    %v165 = vadd.f32 %v164, %v134
    %166 = vadd.xlane.f32.xlu0 %v165
    %v167 = vpop.xlane.xlu0 %166
    %vm168 = vcmask 7168
    %169 = vst.msk [vmem:[%s2] sm:$0xff] %vm168, %v167
    %v170 = vadd.f32 %v143, %v144
    %v171 = vadd.f32 %v170, %v145
    %v172 = vadd.f32 %v171, %v146
    %v173 = vadd.f32 %v172, %v147
    %v174 = vadd.f32 %v173, %v148
    %v175 = vadd.f32 %v174, %v149
    %v176 = vadd.f32 %v175, %v150
    %177 = vadd.xlane.f32.xlu0 %v176
    %v178 = vpop.xlane.xlu0 %177
    %s179 = scalar_lea.vmem %s2, 8
    %180 = vst.msk [vmem:[%s179] sm:$0xff] %vm168, %v178
    %v181 = vadd.f32 %v151, %v152
    %v182 = vadd.f32 %v181, %v153
    %v183 = vadd.f32 %v182, %v154
    %v184 = vadd.f32 %v183, %v155
    %v185 = vadd.f32 %v184, %v156
    %v186 = vadd.f32 %v185, %v157
    %v187 = vadd.f32 %v186, %v158
    %188 = vadd.xlane.f32.xlu0 %v187
    %v189 = vpop.xlane.xlu0 %188
    %s190 = scalar_lea.vmem %s2, 16
    %191 = vst.msk [vmem:[%s190] sm:$0xff] %vm168, %v189
    // Predicated region
    $region18: #{tpu_custom_call.1} parent=1 // pred_check
      _
    $region19: #{tpu_custom_call.1} parent=1 // pred_check_branch
      %193 = sbr.rel (0) target = $region21
    $region20: #{tpu_custom_call.1} parent=1 // pred_region
      _
    $region21: #{tpu_custom_call.1} parent=1 // pred_fallthru
      _
    // Predicated region
    $region22: #{tpu_custom_call.1} parent=1 // pred_check
      _
    $region23: #{tpu_custom_call.1} parent=1 // pred_check_branch
      %195 = sbr.rel (0) target = $region25
    $region24: #{tpu_custom_call.1} parent=1 // pred_region
      _
    $region25: #{tpu_custom_call.1} parent=1 // pred_fallthru
      _
    %196 = vsyncpa [#allocation3], 1
    %197 = vsyncpa [#allocation5], 1

</llo_original>
